<compile_context>
chip_gen: v5e
topology: v5e:2x2
jax: 0.10.0
libtpu: 0.0.40
codegen_flags: <defaults>
</compile_context>

<pallas_src>
import functools

import jax
import jax.numpy as jnp
from jax.experimental import pallas as pl
from jax.experimental.pallas import tpu as pltpu


def _round_up(x, m):
    return ((x + m - 1) // m) * m


@functools.lru_cache(maxsize=1)
def _generation_budgets():
    """Per-generation VMEM sizing: (vmem_limit_bytes, per-block budget)."""
    cap = None
    try:
        info = pltpu.get_tpu_info()
        cap = getattr(info, "vmem_capacity_bytes", None)
    except Exception:
        cap = None
    if not cap:
        cap = 64 * 1024 * 1024          # conservative default (v7x-size VMEM)
    cap = int(cap)
    vmem_limit = (cap * 3) // 4          # 96 MiB on v5e/v6e, 48 MiB on v7x
    block_budget = cap // 8              # 16 MiB on v5e/v6e,  8 MiB on v7x
    return vmem_limit, block_budget


def _pick_batch_tile(B, per_sample_bytes, block_budget_bytes):
    tb = max(1, block_budget_bytes // max(1, per_sample_bytes))
    if B >= 2:
        tb = min(tb, B // 2)            # >= 2 grid steps: pipelining + megacore
    tb = max(1, min(tb, B))
    # Best effort: even number of grid steps so v7x's two TensorCores balance.
    for cand in range(tb, max(0, tb - 8), -1):
        if pl.cdiv(B, cand) % 2 == 0:
            return cand
    return tb


def _mlp(pooled, w1t, b1, w2t, b2):
    """Excitation MLP: Linear -> LeakyReLU(0.01) -> Linear -> Sigmoid."""
    h = jnp.dot(pooled, w1t, preferred_element_type=jnp.float32) + b1
    h = jnp.where(h >= 0, h, 0.01 * h)
    y = jnp.dot(h, w2t, preferred_element_type=jnp.float32) + b2
    return 1.0 / (1.0 + jnp.exp(-y))


# ----------------------------- kernels ------------------------------------ #

def _fused_kernel(x_ref, w1_ref, b1_ref, w2_ref, b2_ref, o_ref, *, inv_hw):
    # x_ref/o_ref: (tb, C, HW); weights are whole-array VMEM-resident blocks.
    # Index x_ref twice (stream it) instead of binding the multi-MiB block once.
    pooled = jnp.sum(x_ref[...], axis=-1) * inv_hw          # mean over true H*W
    y = _mlp(pooled, w1_ref[...], b1_ref[...], w2_ref[...], b2_ref[...])
    o_ref[...] = x_ref[...] * y[:, :, None]


def _pool_kernel(x_ref, sum_ref, *, hw_total, hw_tile):
    # Accumulate the spatial sum across HW tiles (reduction axis = grid axis 1).
    @pl.when(pl.program_id(1) == 0)
    def _():
        sum_ref[...] = jnp.zeros_like(sum_ref)

    x = x_ref[...]                                           # (1, C, hw_tile)
    if hw_total % hw_tile != 0:
        # Mask the out-of-range tail of the (partial) last tile in-kernel.
        pos = (pl.program_id(1) * hw_tile
               + jax.lax.broadcasted_iota(jnp.int32, x.shape, dimension=2))
        x = jnp.where(pos < hw_total, x, 0.0)
    sum_ref[...] += jnp.sum(x, axis=-1)[:, None, :]          # (1, 1, C)


def _scale_mlp_kernel(sum_ref, w1_ref, b1_ref, w2_ref, b2_ref, x_ref, o_ref,
                      y_sc, *, inv_hw):
    # Grid = (B, n_hw).  Compute the per-sample excitation scale once (t == 0)
    # into VMEM scratch, then reweight every HW tile of that sample.
    @pl.when(pl.program_id(1) == 0)
    def _():
        pooled = sum_ref[...][:, 0, :] * inv_hw              # (1, C)
        y_sc[...] = _mlp(pooled, w1_ref[...], b1_ref[...], w2_ref[...],
                         b2_ref[...])
    o_ref[...] = x_ref[...] * y_sc[...][:, :, None]


# ----------------------------- wrapper ------------------------------------ #

def se_layer(x_nchw, w1, b1, w2, b2, *, block_budget_bytes=None):
    """SELayer forward.  x_nchw: (B, C, H, W) float32.
    nn.Linear layout: w1 (Cr, C), b1 (Cr,), w2 (C, Cr), b2 (C,)."""
    B, C, H, W = x_nchw.shape
    HW = H * W
    Cr = w1.shape[0]
    inv_hw = 1.0 / float(HW)

    vmem_limit, default_budget = _generation_budgets()
    block_budget = default_budget if block_budget_bytes is None else block_budget_bytes

    # Bitcast-only reshapes / transposes (no full-tensor pad or slice copies).
    x = jnp.asarray(x_nchw, jnp.float32).reshape(B, C, HW)
    w1t = jnp.asarray(w1, jnp.float32).T                     # (C, Cr)
    w2t = jnp.asarray(w2, jnp.float32).T                     # (Cr, C)
    b1r = jnp.asarray(b1, jnp.float32).reshape(1, Cr)
    b2r = jnp.asarray(b2, jnp.float32).reshape(1, C)

    # VMEM footprint of one sample's (C, HW) block (lane-padded inside VMEM).
    per_sample_bytes = C * _round_up(HW, 128) * 4

    if per_sample_bytes <= block_budget:
        # --------- fused single pass: batch-tiled grid ---------------------
        tb = _pick_batch_tile(B, per_sample_bytes, block_budget)
        n_steps = pl.cdiv(B, tb)

        out = pl.pallas_call(
            functools.partial(_fused_kernel, inv_hw=inv_hw),
            out_shape=jax.ShapeDtypeStruct((B, C, HW), jnp.float32),
            grid=(n_steps,),
            in_specs=[
                pl.BlockSpec((tb, C, HW), lambda b: (b, 0, 0)),
                pl.BlockSpec((C, Cr), lambda b: (0, 0)),     # resident weights
                pl.BlockSpec((1, Cr), lambda b: (0, 0)),
                pl.BlockSpec((Cr, C), lambda b: (0, 0)),
                pl.BlockSpec((1, C), lambda b: (0, 0)),
            ],
            out_specs=pl.BlockSpec((tb, C, HW), lambda b: (b, 0, 0)),
            compiler_params=pltpu.CompilerParams(
                dimension_semantics=("parallel",),
                vmem_limit_bytes=vmem_limit),
        )(x, w1t, b1r, w2t, b2r)
    else:
        # --------- two streamed passes for large activations ---------------
        hw_tile = max(128, (block_budget // (C * 4)) // 128 * 128)
        hw_tile = min(hw_tile, _round_up(HW, 128))
        n_hw = pl.cdiv(HW, hw_tile)

        # Pass 1: HW-tiled global-sum pooling -> (B, 1, C).  Partial last HW
        # tile is masked inside the kernel (no wrapper-side padding).
        sums = pl.pallas_call(
            functools.partial(_pool_kernel, hw_total=HW, hw_tile=hw_tile),
            out_shape=jax.ShapeDtypeStruct((B, 1, C), jnp.float32),
            grid=(B, n_hw),
            in_specs=[pl.BlockSpec((1, C, hw_tile), lambda b, t: (b, 0, t))],
            out_specs=pl.BlockSpec((1, 1, C), lambda b, t: (b, 0, 0)),
            compiler_params=pltpu.CompilerParams(
                dimension_semantics=("parallel", "arbitrary"),
                vmem_limit_bytes=vmem_limit),
        )(x)

        # Pass 2: HW-tiled reweighting with the excitation MLP folded in
        # (computed once per sample under pl.when(t == 0) into VMEM scratch).
        out = pl.pallas_call(
            functools.partial(_scale_mlp_kernel, inv_hw=inv_hw),
            out_shape=jax.ShapeDtypeStruct((B, C, HW), jnp.float32),
            grid=(B, n_hw),
            in_specs=[
                pl.BlockSpec((1, 1, C), lambda b, t: (b, 0, 0)),
                pl.BlockSpec((C, Cr), lambda b, t: (0, 0)),
                pl.BlockSpec((1, Cr), lambda b, t: (0, 0)),
                pl.BlockSpec((Cr, C), lambda b, t: (0, 0)),
                pl.BlockSpec((1, C), lambda b, t: (0, 0)),
                pl.BlockSpec((1, C, hw_tile), lambda b, t: (b, 0, t)),
            ],
            out_specs=pl.BlockSpec((1, C, hw_tile), lambda b, t: (b, 0, t)),
            scratch_shapes=[pltpu.VMEM((1, C), jnp.float32)],
            compiler_params=pltpu.CompilerParams(
                dimension_semantics=("parallel", "arbitrary"),
                vmem_limit_bytes=vmem_limit),
        )(sums, w1t, b1r, w2t, b2r, x)

    return out.reshape(B, C, H, W)


def se_layer_ref(x_nchw, w1, b1, w2, b2):
    """Pure-JAX reference matching the PyTorch forward."""
    pooled = jnp.mean(x_nchw, axis=(2, 3))                   # (B, C)
    h = pooled @ w1.T + b1
    h = jnp.where(h >= 0, h, 0.01 * h)
    y = h @ w2.T + b2
    y = jax.nn.sigmoid(y)
    return x_nchw * y[:, :, None, None]


if __name__ == "__main__":
    key = jax.random.PRNGKey(0)
    k_case1, k_case2 = jax.random.split(key)

    def make_inputs(k, B, C, H, W, Cr):
        kx, kw1, kb1, kw2, kb2 = jax.random.split(k, 5)
        x = jax.random.normal(kx, (B, C, H, W), dtype=jnp.float32)
        # nn.Linear parameter shapes: weight (out, in), bias (out,)
        w1 = jax.random.normal(kw1, (Cr, C), dtype=jnp.float32) * 0.1
        b1 = jax.random.normal(kb1, (Cr,), dtype=jnp.float32) * 0.1
        w2 = jax.random.normal(kw2, (C, Cr), dtype=jnp.float32) * 0.1
        b2 = jax.random.normal(kb2, (C,), dtype=jnp.float32) * 0.1
        return x, w1, b1, w2, b2

    # Case 1: lane-aligned spatial dim (H*W = 256), reduction=16.
    x, w1, b1, w2, b2 = make_inputs(k_case1, 2, 32, 16, 16, 32 // 16)
    ref = se_layer_ref(x, w1, b1, w2, b2)

    out = jax.block_until_ready(se_layer(x, w1, b1, w2, b2))   # fused path
    assert out.shape == x.shape
    assert jnp.allclose(out, ref, atol=1e-5, rtol=1e-5), "fused (aligned) mismatch"

    out = jax.block_until_ready(                               # force streamed path
        se_layer(x, w1, b1, w2, b2, block_budget_bytes=16 * 1024))
    assert jnp.allclose(out, ref, atol=1e-5, rtol=1e-5), "streamed (aligned) mismatch"

    # Case 2: non-lane-aligned spatial dim (H*W = 196) and odd batch,
    # exercising masked partial blocks in both paths (no wrapper-side padding).
    x, w1, b1, w2, b2 = make_inputs(k_case2, 3, 16, 14, 14, 16 // 4)
    ref = se_layer_ref(x, w1, b1, w2, b2)

    out = jax.block_until_ready(se_layer(x, w1, b1, w2, b2))   # fused path
    assert jnp.allclose(out, ref, atol=1e-5, rtol=1e-5), "fused (unaligned) mismatch"

    out = jax.block_until_ready(                               # force streamed path
        se_layer(x, w1, b1, w2, b2, block_budget_bytes=8 * 1024))
    assert jnp.allclose(out, ref, atol=1e-5, rtol=1e-5), "streamed (unaligned) mismatch"

    print("KERNEL_OK")
</pallas_src>

<mosaic_0001>
module attributes {stable_mosaic.version = 11 : i64} {
  func.func @_fused_kernel(%arg0: i32, %arg1: memref<1x32x256xf32, #tpu.memory_space<vmem>>, %arg2: memref<32x2xf32, #tpu.memory_space<vmem>>, %arg3: memref<1x2xf32, #tpu.memory_space<vmem>>, %arg4: memref<2x32xf32, #tpu.memory_space<vmem>>, %arg5: memref<1x32xf32, #tpu.memory_space<vmem>>, %arg6: memref<1x32x256xf32, #tpu.memory_space<vmem>>) attributes {dimension_semantics = [#tpu.dimension_semantics<parallel>], iteration_bounds = array<i64: 2>, scalar_prefetch = 0 : i64, scratch_operands = 0 : i64, tpu.core_type = #tpu.core_type<tc>, window_params = [{transform_indices = @transform_0, window_bounds = array<i64: 1, 32, 256>}, {pipeline_mode = #tpu.pipeline_mode<synchronous>, transform_indices = @transform_1, window_bounds = array<i64: 32, 2>}, {pipeline_mode = #tpu.pipeline_mode<synchronous>, transform_indices = @transform_2, window_bounds = array<i64: 1, 2>}, {pipeline_mode = #tpu.pipeline_mode<synchronous>, transform_indices = @transform_3, window_bounds = array<i64: 2, 32>}, {pipeline_mode = #tpu.pipeline_mode<synchronous>, transform_indices = @transform_4, window_bounds = array<i64: 1, 32>}, {transform_indices = @transform_5, window_bounds = array<i64: 1, 32, 256>}]} {
    %c0 = arith.constant 0 : index
    %c0_0 = arith.constant 0 : index
    %c0_1 = arith.constant 0 : index
    %0 = vector.load %arg1[%c0, %c0_0, %c0_1] : memref<1x32x256xf32, #tpu.memory_space<vmem>>, vector<1x32x256xf32>
    %cst = arith.constant dense<0.000000e+00> : vector<1x32xf32>
    %1 = vector.multi_reduction <add>, %0, %cst [2] : vector<1x32x256xf32> to vector<1x32xf32>
    %cst_2 = arith.constant 3.906250e-03 : f32
    %2 = vector.broadcast %cst_2 : f32 to vector<1x32xf32>
    %3 = arith.mulf %1, %2 : vector<1x32xf32>
    %c0_3 = arith.constant 0 : index
    %c0_4 = arith.constant 0 : index
    %4 = vector.load %arg2[%c0_3, %c0_4] : memref<32x2xf32, #tpu.memory_space<vmem>>, vector<32x2xf32>
    %c0_5 = arith.constant 0 : index
    %c0_6 = arith.constant 0 : index
    %5 = vector.load %arg3[%c0_5, %c0_6] : memref<1x2xf32, #tpu.memory_space<vmem>>, vector<1x2xf32>
    %c0_7 = arith.constant 0 : index
    %c0_8 = arith.constant 0 : index
    %6 = vector.load %arg4[%c0_7, %c0_8] : memref<2x32xf32, #tpu.memory_space<vmem>>, vector<2x32xf32>
    %c0_9 = arith.constant 0 : index
    %c0_10 = arith.constant 0 : index
    %7 = vector.load %arg5[%c0_9, %c0_10] : memref<1x32xf32, #tpu.memory_space<vmem>>, vector<1x32xf32>
    %cst_11 = arith.constant dense<0.000000e+00> : vector<1x2xf32>
    %8 = tpu.matmul %3, %4, %cst_11 {dimension_numbers = #tpu.dot_dimension_numbers<[1], [0], [0], [1], [0, 0, 1, 1], [], []>} : vector<1x32xf32>, vector<32x2xf32>, vector<1x2xf32> -> vector<1x2xf32>
    %9 = arith.addf %8, %5 : vector<1x2xf32>
    %cst_12 = arith.constant 0.000000e+00 : f32
    %10 = vector.broadcast %cst_12 : f32 to vector<1x2xf32>
    %11 = arith.cmpf oge, %9, %10 : vector<1x2xf32>
    %cst_13 = arith.constant 0.00999999977 : f32
    %12 = vector.broadcast %cst_13 : f32 to vector<1x2xf32>
    %13 = arith.mulf %12, %9 : vector<1x2xf32>
    %14 = arith.select %11, %9, %13 : vector<1x2xi1>, vector<1x2xf32>
    %cst_14 = arith.constant dense<0.000000e+00> : vector<1x32xf32>
    %15 = tpu.matmul %14, %6, %cst_14 {dimension_numbers = #tpu.dot_dimension_numbers<[1], [0], [0], [1], [0, 0, 1, 1], [], []>} : vector<1x2xf32>, vector<2x32xf32>, vector<1x32xf32> -> vector<1x32xf32>
    %16 = arith.addf %15, %7 : vector<1x32xf32>
    %cst_15 = arith.constant 0.000000e+00 : f32
    %17 = vector.broadcast %cst_15 : f32 to vector<1x32xf32>
    %18 = arith.subf %17, %16 : vector<1x32xf32>
    %19 = math.exp %18 : vector<1x32xf32>
    %cst_16 = arith.constant 1.000000e+00 : f32
    %20 = vector.broadcast %cst_16 : f32 to vector<1x32xf32>
    %21 = arith.addf %20, %19 : vector<1x32xf32>
    %cst_17 = arith.constant 1.000000e+00 : f32
    %22 = vector.broadcast %cst_17 : f32 to vector<1x32xf32>
    %23 = arith.divf %22, %21 : vector<1x32xf32>
    %c0_18 = arith.constant 0 : index
    %c0_19 = arith.constant 0 : index
    %c0_20 = arith.constant 0 : index
    %24 = vector.load %arg1[%c0_18, %c0_19, %c0_20] : memref<1x32x256xf32, #tpu.memory_space<vmem>>, vector<1x32x256xf32>
    %25 = vector.shape_cast %23 : vector<1x32xf32> to vector<1x32x1xf32>
    %26 = vector.broadcast %25 : vector<1x32x1xf32> to vector<1x32x256xf32>
    %27 = arith.mulf %24, %26 : vector<1x32x256xf32>
    %c0_21 = arith.constant 0 : index
    %c0_22 = arith.constant 0 : index
    %c0_23 = arith.constant 0 : index
    %28 = vector.load %arg6[%c0_21, %c0_22, %c0_23] : memref<1x32x256xf32, #tpu.memory_space<vmem>>, vector<1x32x256xf32>
    tpu.vector_store %arg6[%c0_21, %c0_22, %c0_23], %27 {strides = array<i32>} : memref<1x32x256xf32, #tpu.memory_space<vmem>>, vector<1x32x256xf32>,
    return
  }
  func.func @transform_0(%arg0: i32) -> (i32, i32, i32) {
    %c0_i32 = arith.constant 0 : i32
    %c0_i32_0 = arith.constant 0 : i32
    %c0_i32_1 = arith.constant 0 : i32
    return %arg0, %c0_i32, %c0_i32_0 : i32, i32, i32
  }
  func.func @transform_1(%arg0: i32) -> (i32, i32) {
    %c0_i32 = arith.constant 0 : i32
    %c0_i32_0 = arith.constant 0 : i32
    %c0_i32_1 = arith.constant 0 : i32
    return %c0_i32, %c0_i32_0 : i32, i32
  }
  func.func @transform_2(%arg0: i32) -> (i32, i32) {
    %c0_i32 = arith.constant 0 : i32
    %c0_i32_0 = arith.constant 0 : i32
    %c0_i32_1 = arith.constant 0 : i32
    return %c0_i32, %c0_i32_0 : i32, i32
  }
  func.func @transform_3(%arg0: i32) -> (i32, i32) {
    %c0_i32 = arith.constant 0 : i32
    %c0_i32_0 = arith.constant 0 : i32
    %c0_i32_1 = arith.constant 0 : i32
    return %c0_i32, %c0_i32_0 : i32, i32
  }
  func.func @transform_4(%arg0: i32) -> (i32, i32) {
    %c0_i32 = arith.constant 0 : i32
    %c0_i32_0 = arith.constant 0 : i32
    %c0_i32_1 = arith.constant 0 : i32
    return %c0_i32, %c0_i32_0 : i32, i32
  }
  func.func @transform_5(%arg0: i32) -> (i32, i32, i32) {
    %c0_i32 = arith.constant 0 : i32
    %c0_i32_0 = arith.constant 0 : i32
    %c0_i32_1 = arith.constant 0 : i32
    return %arg0, %c0_i32, %c0_i32_0 : i32, i32, i32
  }
}

</mosaic_0001>

<llo_original>
// kernel: tpu_custom_call.1
$region0: #{tpu_custom_call.1}
  #allocation0 [shape = 'u32[]', space=smem, size = 0x4, offset = 0x4, fixed_abs, tag = 'smem constant byte address 0x4 - core index']
  #allocation1 [shape = 'u32[72,128]{1,0:T(1,128)}', space=vmem, size = 0x9000, scoped, tag = 'internal scratch']
  %s0 = inlined_call_operand.hbm [shape: f32[2,32,256], index: 0, kind: input, shape index: {}]
  %s1 = inlined_call_operand.vmem [shape: f32[32,2], index: 1, kind: input, shape index: {}]
  %s2 = inlined_call_operand.vmem [shape: f32[1,2], index: 2, kind: input, shape index: {}]
  %s3 = inlined_call_operand.vmem [shape: f32[2,32], index: 3, kind: input, shape index: {}]
  %s4 = inlined_call_operand.vmem [shape: f32[1,32], index: 4, kind: input, shape index: {}]
  %s5 = inlined_call_operand.hbm [shape: f32[2,32,256], index: 5, kind: output, shape index: {}]
  %s6 = sld [smem:[#allocation0]]
  $region57: #{tpu_custom_call.1} parent=0
    _
  %s8 = ssub.s32 1, %s6
  %s9 = scalar_select 0, %s8, %s6
  $region1: #{tpu_custom_call.1} parent=0
    #allocation2 [shape = 'u8[65536]{0}', space=vmem, size = 0x10000, scoped, tag = 'input window, operand 0']
    #allocation3 [shape = 's32[2]{0}', space=sflag, size = 0x8, scoped, tag = 'scoped memory for tpu_custom_call.1']
    #allocation4 [shape = 's32[2]{0}', space=sflag, size = 0x8, scoped, tag = 'scoped memory for tpu_custom_call.1']
    #allocation5 [shape = 'u8[65536]{0}', space=vmem, size = 0x10000, scoped, tag = 'output window, operand 0']
    %10 = vsyncpa [#allocation3], 0
    %s11 = scalar_lea.sflag [#allocation3], 1
    %12 = vsyncpa %s11, 0
    %13 = vsyncpa [#allocation4], 0
    %s14 = scalar_lea.sflag [#allocation4], 1
    %15 = vsyncpa %s14, 0
    loop: start=0, step=1, limit=4
    $region2: #{tpu_custom_call.1} parent=1 // loop_pre_header
      _
    $region3: #{tpu_custom_call.1} parent=1 // loop_header
      %s17 = sphi 0, %s21
      %p18 = scmp.ge.s32.totalorder %s17, 4
      %s27 = sphi 0, %s29
      %s30 = sphi 0, %s27
      %s31 = sphi 0, %s30
      %s47 = sphi 0, %s31
      %s51 = sphi 0, %s51
      %s53 = sphi 0, %s51
      %s54 = sphi 0, %s53
      %s68 = sphi 0, %s54
      %s72 = sphi 0, %s72
      %s74 = sphi 0, %s72
      %s75 = sphi 0, %s74
      %s89 = sphi 0, %s75
      %s93 = sphi 0, %s93
      %s95 = sphi 0, %s93
      %s96 = sphi 0, %s95
      %s110 = sphi 0, %s96
      %s114 = sphi 0, %s114
      %s116 = sphi 0, %s114
      %s117 = sphi 0, %s116
      %s131 = sphi 0, %s117
      %s137 = sphi 0, %s139
      %s140 = sphi 0, %s137
      %s141 = sphi 0, %s140
      %s157 = sphi 0, %s141
    $region4: #{tpu_custom_call.1} parent=1 // loop_header_branch
      %20 = sbr.rel (%p18) target = $region8
    $region5: #{tpu_custom_call.1} parent=1 // loop_body
      %s22 = ssub.s32 %s17, 1
      %s23 = ssub.s32 %s17, 2
      %s24 = sadd.s32 %s17, 1
      %s25 = ssub.s32 %s17, %s24
      %p26 = scmp.eq.s32.totalorder %s25, 0
      %s28 = sadd.s32 %s27, 1
      %s29 = scalar_select %p26, %s27, %s28
      %p32 = pneg %p26
      %p33 = scmp.eq.s32.totalorder %s17, 1
      %p34 = por %p32, %p33
      %p35 = scmp.ne.s32.totalorder %s27, %s30
      %p36 = scmp.eq.s32.totalorder %s17, 0
      %p37 = por %p35, %p36
      %p38 = scmp.ne.s32.totalorder %s27, %s30
      %p39 = scmp.eq.s32.totalorder %s22, 1
      %p40 = por %p38, %p39
      %p41 = scmp.ne.s32.totalorder %s30, %s31
      %p42 = scmp.eq.s32.totalorder %s22, 0
      %p43 = por %p41, %p42
      %p44 = scmp.ne.s32.totalorder %s30, %s31
      %p45 = scmp.eq.s32.totalorder %s23, 1
      %p46 = por %p44, %p45
      %p48 = scmp.ne.s32.totalorder %s31, %s47
      %p49 = scmp.eq.s32.totalorder %s23, 0
      %p50 = por %p48, %p49
      %s52 = sadd.s32 %s51, 1
      %p55 = scmp.eq.s32.totalorder %s17, 1
      %p56 = scmp.ne.s32.totalorder %s51, %s53
      %p57 = scmp.eq.s32.totalorder %s17, 0
      %p58 = por %p56, %p57
      %p59 = scmp.ne.s32.totalorder %s51, %s53
      %p60 = scmp.eq.s32.totalorder %s22, 1
      %p61 = por %p59, %p60
      %p62 = scmp.ne.s32.totalorder %s53, %s54
      %p63 = scmp.eq.s32.totalorder %s22, 0
      %p64 = por %p62, %p63
      %p65 = scmp.ne.s32.totalorder %s53, %s54
      %p66 = scmp.eq.s32.totalorder %s23, 1
      %p67 = por %p65, %p66
      %p69 = scmp.ne.s32.totalorder %s54, %s68
      %p70 = scmp.eq.s32.totalorder %s23, 0
      %p71 = por %p69, %p70
      %s73 = sadd.s32 %s72, 1
      %p76 = scmp.eq.s32.totalorder %s17, 1
      %p77 = scmp.ne.s32.totalorder %s72, %s74
      %p78 = scmp.eq.s32.totalorder %s17, 0
      %p79 = por %p77, %p78
      %p80 = scmp.ne.s32.totalorder %s72, %s74
      %p81 = scmp.eq.s32.totalorder %s22, 1
      %p82 = por %p80, %p81
      %p83 = scmp.ne.s32.totalorder %s74, %s75
      %p84 = scmp.eq.s32.totalorder %s22, 0
      %p85 = por %p83, %p84
      %p86 = scmp.ne.s32.totalorder %s74, %s75
      %p87 = scmp.eq.s32.totalorder %s23, 1
      %p88 = por %p86, %p87
      %p90 = scmp.ne.s32.totalorder %s75, %s89
      %p91 = scmp.eq.s32.totalorder %s23, 0
      %p92 = por %p90, %p91
      %s94 = sadd.s32 %s93, 1
      %p97 = scmp.eq.s32.totalorder %s17, 1
      %p98 = scmp.ne.s32.totalorder %s93, %s95
      %p99 = scmp.eq.s32.totalorder %s17, 0
      %p100 = por %p98, %p99
      %p101 = scmp.ne.s32.totalorder %s93, %s95
      %p102 = scmp.eq.s32.totalorder %s22, 1
      %p103 = por %p101, %p102
      %p104 = scmp.ne.s32.totalorder %s95, %s96
      %p105 = scmp.eq.s32.totalorder %s22, 0
      %p106 = por %p104, %p105
      %p107 = scmp.ne.s32.totalorder %s95, %s96
      %p108 = scmp.eq.s32.totalorder %s23, 1
      %p109 = por %p107, %p108
      %p111 = scmp.ne.s32.totalorder %s96, %s110
      %p112 = scmp.eq.s32.totalorder %s23, 0
      %p113 = por %p111, %p112
      %s115 = sadd.s32 %s114, 1
      %p118 = scmp.eq.s32.totalorder %s17, 1
      %p119 = scmp.ne.s32.totalorder %s114, %s116
      %p120 = scmp.eq.s32.totalorder %s17, 0
      %p121 = por %p119, %p120
      %p122 = scmp.ne.s32.totalorder %s114, %s116
      %p123 = scmp.eq.s32.totalorder %s22, 1
      %p124 = por %p122, %p123
      %p125 = scmp.ne.s32.totalorder %s116, %s117
      %p126 = scmp.eq.s32.totalorder %s22, 0
      %p127 = por %p125, %p126
      %p128 = scmp.ne.s32.totalorder %s116, %s117
      %p129 = scmp.eq.s32.totalorder %s23, 1
      %p130 = por %p128, %p129
      %p132 = scmp.ne.s32.totalorder %s117, %s131
      %p133 = scmp.eq.s32.totalorder %s23, 0
      %p134 = por %p132, %p133
      %s135 = ssub.s32 %s17, %s24
      %p136 = scmp.eq.s32.totalorder %s135, 0
      %s138 = sadd.s32 %s137, 1
      %s139 = scalar_select %p136, %s137, %s138
      %p142 = pneg %p136
      %p143 = scmp.eq.s32.totalorder %s17, 1
      %p144 = por %p142, %p143
      %p145 = scmp.ne.s32.totalorder %s137, %s140
      %p146 = scmp.eq.s32.totalorder %s17, 0
      %p147 = por %p145, %p146
      %p148 = scmp.ne.s32.totalorder %s137, %s140
      %p149 = scmp.eq.s32.totalorder %s22, 1
      %p150 = por %p148, %p149
      %p151 = scmp.ne.s32.totalorder %s140, %s141
      %p152 = scmp.eq.s32.totalorder %s22, 0
      %p153 = por %p151, %p152
      %p154 = scmp.ne.s32.totalorder %s140, %s141
      %p155 = scmp.eq.s32.totalorder %s23, 1
      %p156 = por %p154, %p155
      %p158 = scmp.ne.s32.totalorder %s141, %s157
      %p159 = scmp.eq.s32.totalorder %s23, 0
      %p160 = por %p158, %p159
      %p161 = scmp.le.s32.totalorder 1, %s17
      %p162 = scmp.lt.s32.totalorder %s17, 3
      %p163 = pnand %p161, %p162
      %p164 = pneg %p163
      // Predicated region
      $region9: #{tpu_custom_call.1} parent=5 // pred_check
        _
      $region10: #{tpu_custom_call.1} parent=5 // pred_check_branch
        %166 = sbr.rel (%p163) target = $region12
      $region11: #{tpu_custom_call.1} parent=5 // pred_region
        %s167 = ssub.s32 %s17, 1
        // Predicated region
        $region13: #{tpu_custom_call.1} parent=11 // pred_check
          %p168 = pneg %p64
        $region14: #{tpu_custom_call.1} parent=11 // pred_check_branch
          %170 = sbr.rel (%p168) target = $region16
        $region15: #{tpu_custom_call.1} parent=11 // pred_region
          _
        $region16: #{tpu_custom_call.1} parent=11 // pred_fallthru
          _
        // Predicated region
        $region17: #{tpu_custom_call.1} parent=11 // pred_check
          %p171 = pneg %p85
        $region18: #{tpu_custom_call.1} parent=11 // pred_check_branch
          %173 = sbr.rel (%p171) target = $region20
        $region19: #{tpu_custom_call.1} parent=11 // pred_region
          _
        $region20: #{tpu_custom_call.1} parent=11 // pred_fallthru
          _
        // Predicated region
        $region21: #{tpu_custom_call.1} parent=11 // pred_check
          %p174 = pneg %p106
        $region22: #{tpu_custom_call.1} parent=11 // pred_check_branch
          %176 = sbr.rel (%p174) target = $region24
        $region23: #{tpu_custom_call.1} parent=11 // pred_region
          _
        $region24: #{tpu_custom_call.1} parent=11 // pred_fallthru
          _
        // Predicated region
        $region25: #{tpu_custom_call.1} parent=11 // pred_check
          %p177 = pneg %p127
        $region26: #{tpu_custom_call.1} parent=11 // pred_check_branch
          %179 = sbr.rel (%p177) target = $region28
        $region27: #{tpu_custom_call.1} parent=11 // pred_region
          _
        $region28: #{tpu_custom_call.1} parent=11 // pred_fallthru
          _
      $region12: #{tpu_custom_call.1} parent=5 // pred_fallthru
        _
      %p180 = scmp.lt.s32.totalorder %s17, 2
      // Predicated region
      $region29: #{tpu_custom_call.1} parent=5 // pred_check
        %p181 = pneg %p180
      $region30: #{tpu_custom_call.1} parent=5 // pred_check_branch
        %183 = sbr.rel (%p181) target = $region32
      $region31: #{tpu_custom_call.1} parent=5 // pred_region
        // Predicated region
        $region33: #{tpu_custom_call.1} parent=31 // pred_check
          %p184 = pneg %p37
        $region34: #{tpu_custom_call.1} parent=31 // pred_check_branch
          %186 = sbr.rel (%p184) target = $region36
        $region35: #{tpu_custom_call.1} parent=31 // pred_region
          %s187 = sand.u32 %s27, 1
          %s188 = scalar_lea.sflag [#allocation3], %s187
          %s189 = sand.u32 %s27, 1
          %s190 = smul.addr %s189, 64
          %s191 = scalar_lea.vmem [#allocation2], %s190
          %193 = vsyncadd %s188, 0
          %s194 = smul.addr %s17, 8
          %s195 = smul.addr %s194, 8
          %s196 = scalar_lea.hbm %s0, %s195
          %s197 = sshll.u32 %s196, 4
          %s198 = int_to_ptr.hbm [resolvable:$true] %s197
          %s199 = sshll.u32 %s191, 4
          %s200 = int_to_ptr.vmem [resolvable:$true] %s199
          %205 = dma.hbm_to_vmem [thread:$0]  %s198, 1024, %s200, %s188, 256, 256, 16
        $region36: #{tpu_custom_call.1} parent=31 // pred_fallthru
          _
      $region32: #{tpu_custom_call.1} parent=5 // pred_fallthru
        _
      %p206 = scmp.le.s32.totalorder 1, %s17
      %p207 = scmp.lt.s32.totalorder %s17, 3
      %p208 = pnand %p206, %p207
      %p209 = pneg %p208
      // Predicated region
      $region37: #{tpu_custom_call.1} parent=5 // pred_check
        _
      $region38: #{tpu_custom_call.1} parent=5 // pred_check_branch
        %211 = sbr.rel (%p208) target = $region40
      $region39: #{tpu_custom_call.1} parent=5 // pred_region
        %s212 = ssub.s32 %s17, 1
        %s213 = sand.u32 %s30, 1
        %s214 = scalar_lea.sflag [#allocation3], %s213
        %s215 = sand.u32 %s30, 1
        %s216 = smul.addr %s215, 64
        %s217 = scalar_lea.vmem [#allocation2], %s216
        // Predicated region
        $region41: #{tpu_custom_call.1} parent=39 // pred_check
          %p218 = pneg %p43
        $region42: #{tpu_custom_call.1} parent=39 // pred_check_branch
          %220 = sbr.rel (%p218) target = $region44
        $region43: #{tpu_custom_call.1} parent=39 // pred_region
          %222 = dma.done %s214, 1024
        $region44: #{tpu_custom_call.1} parent=39 // pred_fallthru
          _
        %s223 = sand.u32 %s30, 1
        %s224 = scalar_lea.sflag [#allocation3], %s223
        %s225 = sand.u32 %s30, 1
        %s226 = smul.addr %s225, 64
        %s227 = scalar_lea.vmem [#allocation2], %s226
        %p228 = pneg %p43
        %p229 = pneg %p40
        %p230 = pneg %p64
        %p231 = pneg %p61
        %p232 = pneg %p85
        %p233 = pneg %p82
        %p234 = pneg %p106
        %p235 = pneg %p103
        %p236 = pneg %p127
        %p237 = pneg %p124
        %p238 = pneg %p153
        %p239 = pneg %p150
        %s240 = sand.u32 %s140, 1
        %s241 = scalar_lea.sflag [#allocation4], %s240
        %s242 = sand.u32 %s140, 1
        %s243 = smul.addr %s242, 64
        %s244 = scalar_lea.vmem [#allocation5], %s243
        %v245 = vld [vmem:[%s217] sm:$0xff]
        %v246 = vld [vmem:[%s217 + $0x8] sm:$0xff]
        %v247 = vld [vmem:[%s217 + $0x10] sm:$0xff]
        %v248 = vld [vmem:[%s217 + $0x18] sm:$0xff]
        %v249 = vld [vmem:[%s217 + $0x20] sm:$0xff]
        %v250 = vld [vmem:[%s217 + $0x28] sm:$0xff]
        %v251 = vld [vmem:[%s217 + $0x30] sm:$0xff]
        %v252 = vld [vmem:[%s217 + $0x38] sm:$0xff]
        %v253 = vadd.f32 %v245, %v246
        %254 = vadd.xlane.f32.xlu0 %v253
        %v255 = vpop.xlane.xlu0 %254
        %v256 = vadd.f32 %v247, %v248
        %257 = vadd.xlane.f32.xlu0 %v256
        %v258 = vpop.xlane.xlu0 %257
        %v259 = vadd.f32 %v249, %v250
        %260 = vadd.xlane.f32.xlu0 %v259
        %v261 = vpop.xlane.xlu0 %260
        %v262 = vadd.f32 %v251, %v252
        %263 = vadd.xlane.f32.xlu0 %v262
        %v264 = vpop.xlane.xlu0 %263
        %v265 = vmul.f32 %v255, 0.00390625
        %v266 = vmul.f32 %v258, 0.00390625
        %v267 = vmul.f32 %v261, 0.00390625
        %v268 = vmul.f32 %v264, 0.00390625
        %v269 = vld [vmem:[%s1] sm:$0xff]
        %v270 = vld [vmem:[%s1 + $0x8] sm:$0xff]
        %v271 = vld [vmem:[%s1 + $0x10] sm:$0xff]
        %v272 = vld [vmem:[%s1 + $0x18] sm:$0xff]
        %v273 = vld [vmem:[%s2] sm:$0x1]
        %v274 = vld [vmem:[%s3] sm:$0x3]
        %v275 = vld [vmem:[%s4] sm:$0x1]
        %v280 = vlaneseq
        %v281 = vand.u32 %v280, 127
        %v282 = vperm.slane %v265, %v281
        %v283 = vadd.s32 %v281, 4294967288
        %v284 = vperm.slane %v266, %v283
        %vm285 = vcmask 130112
        %v286 = vsel %vm285, %v284, %v282
        %v287 = vadd.s32 %v281, 4294967280
        %v288 = vperm.slane %v267, %v287
        %vm289 = vcmask 195712
        %v290 = vsel %vm289, %v288, %v286
        %v291 = vadd.s32 %v281, 4294967272
        %v292 = vperm.slane %v268, %v291
        %vm293 = vcmask 261312
        %v294 = vsel %vm293, %v292, %v290
        %vm295 = vcmask 261120
        %v296 = vsel %vm295, %v294, 0
        %298 = vmatpush.msra.mxu0 0.0
        %299 = vmatpush.msra.mxu0 0.0
        %300 = vmatpush.msra.mxu0 0.0
        %301 = vmatpush.msra.mxu0 0.0
        %302 = vmatpush.msra.mxu0 0.0
        %303 = vmatpush.msra.mxu0 0.0
        %304 = vmatpush.msra.mxu0 0.0
        %305 = vmatpush.msra.mxu0 0.0
        %306 = vmatpush.msra.mxu0 0.0
        %307 = vmatpush.msra.mxu0 0.0
        %308 = vmatpush.msra.mxu0 0.0
        %309 = vmatpush.msra.mxu0 0.0
        %310 = vmatpush.msra.mxu0 %v272
        %311 = vmatpush.msra.mxu0 %v271
        %312 = vmatpush.msra.mxu0 %v270
        %313 = vmatpush.msra.mxu0 %v269
        %314 = vmatmul.f32.gmra.mxu0 %v296
        %v315 = vpop.f32.mrf.mxu0
        %v316 = vadd.f32 %v273, %v315
        %317 = vdwg.mxu0
        %vm318 = vcmp.ge.f32.partialorder %v316, 0.0
        %v319 = vmul.f32 %v316, 0.01
        %v320 = vsel %vm318, %v316, %v319
        %vm321 = vcmask 15360
        %v323 = vsel %vm321, %v320, 0
        %vm325 = vcmask 1041408
        %v327 = vsel %vm325, %v274, 0
        %329 = vmatpush.msra.mxu0 0.0
        %330 = vmatpush.msra.mxu0 0.0
        %331 = vmatpush.msra.mxu0 0.0
        %332 = vmatpush.msra.mxu0 0.0
        %333 = vmatpush.msra.mxu0 0.0
        %334 = vmatpush.msra.mxu0 0.0
        %335 = vmatpush.msra.mxu0 0.0
        %336 = vmatpush.msra.mxu0 0.0
        %337 = vmatpush.msra.mxu0 0.0
        %338 = vmatpush.msra.mxu0 0.0
        %339 = vmatpush.msra.mxu0 0.0
        %340 = vmatpush.msra.mxu0 0.0
        %341 = vmatpush.msra.mxu0 0.0
        %342 = vmatpush.msra.mxu0 0.0
        %343 = vmatpush.msra.mxu0 0.0
        %344 = vmatpush.msra.mxu0 %v327
        %345 = vmatmul.f32.gmra.mxu0 %v323
        %v346 = vpop.f32.mrf.mxu0
        %v347 = vadd.f32 %v275, %v346
        %348 = vdwg.mxu0
        %v349 = vsub.f32 0.0, %v347
        %v350 = vmul.f32 %v349, 1.442695
        %v351 = vpow.pop %v350
        %v352 = vadd.f32 %v351, 1.0
        %v353 = vrcp.pop %v352
        %v354 = vmul.f32 %v352, %v353
        %v355 = vsub.f32 1.0, %v354
        %v356 = vmul.f32 %v353, %v355
        %v357 = vadd.f32 %v353, %v356
        %vm358 = vweird.f32 %v352
        %vm359 = vweird.f32 %v353
        %vm360 = vmor %vm358, %vm359
        %v361 = vsel %vm360, %v353, %v357
        %v362 = vand.u32 2147483647, %v352
        %vm363 = vcmp.eq.f32.partialorder %v362, 8.507059e+37
        %v364 = vand.u32 %v352, 2147483648
        %v365 = vor.u32 1.1754944e-38, %v364
        %v366 = vsel %vm363, %v365, %v361
        %v367 = vmul.f32 1.0, %v366
        %v368 = vperm.slane %v367, 0
        %v369 = vlaneseq
        %v370 = vshrl.u32 %v369, 7
        %372 = vset.pattern.permute.xlu0 %v370
        %373 = vperm.xlu0 %372, %v368
        %v374 = vpop.permute.xlu0 %373
        %v375 = vlaneseq
        %v376 = vshrl.u32 %v375, 7
        %v377 = vadd.s32 %v376, 8
        %378 = vset.pattern.permute.xlu0 %v377
        %379 = vperm.xlu0 %378, %v368
        %v380 = vpop.permute.xlu0 %379
        %v381 = vlaneseq
        %v382 = vshrl.u32 %v381, 7
        %v383 = vadd.s32 %v382, 16
        %384 = vset.pattern.permute.xlu0 %v383
        %385 = vperm.xlu0 %384, %v368
        %v386 = vpop.permute.xlu0 %385
        %v387 = vlaneseq
        %v388 = vshrl.u32 %v387, 7
        %v389 = vadd.s32 %v388, 24
        %390 = vset.pattern.permute.xlu0 %v389
        %391 = vperm.xlu0 %390, %v368
        %v392 = vpop.permute.xlu0 %391
        %v393 = vmul.f32 %v245, %v374
        %v394 = vmul.f32 %v246, %v374
        %v395 = vmul.f32 %v247, %v380
        %v396 = vmul.f32 %v248, %v380
        %v397 = vmul.f32 %v249, %v386
        %v398 = vmul.f32 %v250, %v386
        %v399 = vmul.f32 %v251, %v392
        %v400 = vmul.f32 %v252, %v392
        %401 = vst [vmem:[%s244] sm:$0xff] %v393
        %402 = vst [vmem:[%s244 + $0x8] sm:$0xff] %v394
        %403 = vst [vmem:[%s244 + $0x10] sm:$0xff] %v395
        %404 = vst [vmem:[%s244 + $0x18] sm:$0xff] %v396
        %405 = vst [vmem:[%s244 + $0x20] sm:$0xff] %v397
        %406 = vst [vmem:[%s244 + $0x28] sm:$0xff] %v398
        %407 = vst [vmem:[%s244 + $0x30] sm:$0xff] %v399
        %408 = vst [vmem:[%s244 + $0x38] sm:$0xff] %v400
        %s409 = sand.u32 %s140, 1
        %s410 = scalar_lea.sflag [#allocation4], %s409
        %s411 = sand.u32 %s140, 1
        %s412 = smul.addr %s411, 64
        %s413 = scalar_lea.vmem [#allocation5], %s412
        // Predicated region
        $region45: #{tpu_custom_call.1} parent=39 // pred_check
          %p414 = pneg %p150
        $region46: #{tpu_custom_call.1} parent=39 // pred_check_branch
          %416 = sbr.rel (%p414) target = $region48
        $region47: #{tpu_custom_call.1} parent=39 // pred_region
          %418 = vsyncadd %s410, 0
          %s419 = smul.addr %s22, 8
          %s420 = smul.addr %s419, 8
          %s421 = scalar_lea.hbm %s5, %s420
          %s422 = sshll.u32 %s413, 4
          %s423 = int_to_ptr.vmem [resolvable:$true] %s422
          %s424 = sshll.u32 %s421, 4
          %s425 = int_to_ptr.hbm [resolvable:$true] %s424
          %430 = dma.vmem_to_hbm [thread:$0]  %s423, 1024, %s425, %s410, 256, 256, 16
        $region48: #{tpu_custom_call.1} parent=39 // pred_fallthru
          _
      $region40: #{tpu_custom_call.1} parent=5 // pred_fallthru
        _
      %p431 = scmp.le.s32.totalorder 2, %s17
      // Predicated region
      $region49: #{tpu_custom_call.1} parent=5 // pred_check
        %p432 = pneg %p431
      $region50: #{tpu_custom_call.1} parent=5 // pred_check_branch
        %434 = sbr.rel (%p432) target = $region52
      $region51: #{tpu_custom_call.1} parent=5 // pred_region
        %s435 = ssub.s32 %s17, 2
        // Predicated region
        $region53: #{tpu_custom_call.1} parent=51 // pred_check
          %p436 = pneg %p156
        $region54: #{tpu_custom_call.1} parent=51 // pred_check_branch
          %438 = sbr.rel (%p436) target = $region56
        $region55: #{tpu_custom_call.1} parent=51 // pred_region
          %s439 = sand.u32 %s141, 1
          %s440 = scalar_lea.sflag [#allocation4], %s439
          %s441 = sand.u32 %s141, 1
          %s442 = smul.addr %s441, 64
          %s443 = scalar_lea.vmem [#allocation5], %s442
          %445 = dma.done %s440, 1024
        $region56: #{tpu_custom_call.1} parent=51 // pred_fallthru
          _
      $region52: #{tpu_custom_call.1} parent=5 // pred_fallthru
        _
    $region6: #{tpu_custom_call.1} parent=1 // loop_footer
      %s21 = sadd.s32 1, %s17
    $region7: #{tpu_custom_call.1} parent=1 // loop_footer_branch
      %16 = sbr.rel target = $region3
    $region8: #{tpu_custom_call.1} parent=1 // loop_exit
      _
    %446 = vsyncpa [#allocation3], 1
    %s447 = scalar_lea.sflag [#allocation3], 1
    %448 = vsyncpa %s447, 1
    %449 = vsyncpa [#allocation4], 1
    %s450 = scalar_lea.sflag [#allocation4], 1
    %451 = vsyncpa %s450, 1

</llo_original>
